<compile_context>
chip_gen: v7x
topology: tpu7x:2x2x1
jax: 0.10.0
libtpu: 0.0.40
codegen_flags: <defaults>
</compile_context>

<pallas_src>
import jax
import jax.numpy as jnp
from jax import lax
from jax.experimental import pallas as pl
from jax.experimental.pallas import tpu as pltpu

# ----------------------------- config (synthetic "opt") ----------------------
VOCAB = 32          # len(vocab)
DIM_E = 16          # opt['dim_embedding']
DIM_V = 16          # opt['dim_v']
DIM_H = 32          # opt['dim_h']
NB_LAYERS = 1       # opt['nb_layers']
DIN = DIM_E + DIM_V
LANE = 128          # lane-dense output width (>= VOCAB)


# ----------------------------- Pallas kernel ---------------------------------
def make_kernel(Bp, T, H):
    def kernel(x_ref, len_ref, wih_ref, whh_ref, b_ref, wcls_ref,
               out_ref, h_hist):
        # weights stay resident in VMEM/vregs for the whole recurrence
        wih = wih_ref[...]            # ((Din), 4H) bf16, g-gate cols pre-scaled x2
        whh = whh_ref[...]            # (H, 4H)    bf16, g-gate cols pre-scaled x2
        b = b_ref[...]                # (1, 4H)    f32,  g-gate lanes pre-scaled x2
        lens = len_ref[...]           # (Bp, 1)    f32   per-row valid length

        # --- 1) hoisted input projection: one ((T+1)*Bp, Din) x (Din, 4H)
        #        bf16 MXU matmul (block 0 is a_feat), bias added once, result
        #        kept in vregs (only (T+1)*Bp x 4H = 9 f32 vregs at T=8).
        xw = jnp.dot(x_ref[...], wih,
                     preferred_element_type=jnp.float32) + b     # ((T+1)*Bp, 4H) f32

        # --- 2) a_feat step specialized for the known zero state (no h0@Whh,
        #        no f*c0).  Single EUP pass: g lanes hold 2*g, so
        #        tanh(g) = 2*sigmoid(2g) - 1 (VPU fix-up).
        s0 = jax.nn.sigmoid(xw[0:Bp, :])                         # (Bp, 4H)
        c = s0[:, 0:H] * (2.0 * s0[:, 2 * H:3 * H] - 1.0)        # c1 = i * tanh(g)
        h = s0[:, 3 * H:4 * H] * jnp.tanh(c)                     # h1 = o * tanh(c1)

        # --- 3) recurrence (static Python unroll, T small): only
        #        bf16(h) @ Whh + one full-width sigmoid + one small tanh sit
        #        on the serial h->h chain.  PyTorch gate order i, f, g, o.
        for t in range(T):
            gates = xw[(t + 1) * Bp:(t + 2) * Bp, :] + jnp.dot(
                h.astype(jnp.bfloat16), whh,
                preferred_element_type=jnp.float32)              # (Bp, 4H) f32
            s = jax.nn.sigmoid(gates)                            # ONE EUP pass
            c = s[:, H:2 * H] * c + s[:, 0:H] * (2.0 * s[:, 2 * H:3 * H] - 1.0)
            h = s[:, 3 * H:4 * H] * jnp.tanh(c)
            # length mask fused here (off the h->h chain); the carried h stays
            # unmasked, matching pack_padded semantics for the returned pred.
            mask_t = (lens > float(t)).astype(jnp.float32)       # (Bp, 1)
            h_hist[t * Bp:(t + 1) * Bp, :] = h * mask_t

        # --- 4) hoisted classifier: one (T*Bp, H) x (H, 128) bf16 MXU matmul,
        #        lane-dense (T*Bp, 128) f32 store.
        out_ref[...] = jnp.dot(h_hist[...].astype(jnp.bfloat16), wcls_ref[...],
                               preferred_element_type=jnp.float32)

    return kernel


# ----------------------------- wrapper ---------------------------------------
@jax.jit
def question_gen_forward(v_feat, a_feat, questions, params):
    """Reproduces question_gen.forward.

    v_feat:    (B, dim_v) float32
    a_feat:    (B, dim_embedding + dim_v) float32
    questions: (B, T) int32   (token id 0 == padding)
    returns:   (B, T, VOCAB) float32
    """
    B, T = questions.shape
    Bp = ((B + 7) // 8) * 8        # pad batch to the 8-sublane tile
    pad = Bp - B
    # NOTE: if the caller has many sequences, batch them into one call
    # (per-step cost is ~independent of Bp up to ~128 rows).

    # glue: embedding gather + concat with broadcast v_feat (XLA side)
    emb = params["embed"][questions]                                 # (B, T, E)
    v_exp = jnp.broadcast_to(v_feat[:, None, :], (B, T, DIM_V))      # (B, T, Dv)
    x = jnp.concatenate([emb, v_exp], axis=-1).astype(jnp.float32)   # (B, T, Din)

    x_p = jnp.pad(x, ((0, pad), (0, 0), (0, 0)))                     # (Bp, T, Din)
    a_p = jnp.pad(a_feat.astype(jnp.float32), ((0, pad), (0, 0)))    # (Bp, Din)
    x_tbd = jnp.transpose(x_p, (1, 0, 2)).reshape(T * Bp, DIN)       # (T*Bp, Din)
    # a_feat folded in as row-block 0 so ONE matmul covers the warm-up step too
    x_all = jnp.concatenate([a_p, x_tbd], axis=0).astype(jnp.bfloat16)  # ((T+1)*Bp, Din)

    # g-gate (tanh) columns pre-scaled by 2: enables tanh(x) = 2*sigmoid(2x)-1
    # with a single sigmoid pass over the full gates vreg in the kernel.
    gate_scale = jnp.concatenate(
        [jnp.ones((2 * DIM_H,), jnp.float32),
         jnp.full((DIM_H,), 2.0, jnp.float32),
         jnp.ones((DIM_H,), jnp.float32)])                           # (4H,)
    wih_t = (params["w_ih"].T * gate_scale[None, :]).astype(jnp.bfloat16)   # (Din, 4H)
    whh_t = (params["w_hh"].T * gate_scale[None, :]).astype(jnp.bfloat16)   # (H, 4H)
    bias = ((params["b_ih"] + params["b_hh"]) * gate_scale)[None, :]        # (1, 4H) f32
    # lane-dense classifier: zero-pad vocab up to 128 lanes
    wcls_pad = (jnp.zeros((DIM_H, LANE), jnp.float32)
                .at[:, :VOCAB].set(params["w_cls"].T)).astype(jnp.bfloat16)  # (H, 128)

    # process_lengths_sort semantics: the batch sort/unsort is only a
    # pack_padded_sequence optimization and cancels out -> per-row lengths,
    # applied as a mask inside the kernel.
    max_len = T - 1
    nzeros = jnp.sum((questions == 0).astype(jnp.int32), axis=1)     # (B,)
    lengths = jnp.minimum(max_len, (max_len - nzeros) + 1).astype(jnp.float32)
    len_p = jnp.pad(lengths, (0, pad))[:, None]                      # (Bp, 1)

    vmem = pl.BlockSpec(memory_space=pltpu.MemorySpace.VMEM)
    out2d = pl.pallas_call(
        make_kernel(Bp, T, DIM_H),
        out_shape=jax.ShapeDtypeStruct((T * Bp, LANE), jnp.float32),
        in_specs=[vmem] * 6,
        out_specs=vmem,
        scratch_shapes=[
            pltpu.VMEM((T * Bp, DIM_H), jnp.float32),   # 2D h history for the classifier
        ],
    )(x_all, len_p, wih_t, whh_t, bias, wcls_pad)

    # unpad: (T*Bp, 128) -> (B, T, VOCAB); mask already applied in-kernel
    out = out2d.reshape(T, Bp, LANE)[:, :B, :VOCAB].transpose(1, 0, 2)
    return out


# ----------------------------- pure-JAX reference (f32) ----------------------
def reference_forward(v_feat, a_feat, questions, params):
    B, T = questions.shape
    emb = params["embed"][questions]
    v_exp = jnp.broadcast_to(v_feat[:, None, :], (B, T, DIM_V))
    x = jnp.concatenate([emb, v_exp], axis=-1)

    w_ih, w_hh = params["w_ih"], params["w_hh"]
    b = params["b_ih"] + params["b_hh"]
    H = DIM_H

    def cell(x_t, h, c):
        g = x_t @ w_ih.T + h @ w_hh.T + b
        i = jax.nn.sigmoid(g[:, 0:H]); f = jax.nn.sigmoid(g[:, H:2 * H])
        gg = jnp.tanh(g[:, 2 * H:3 * H]); o = jax.nn.sigmoid(g[:, 3 * H:4 * H])
        c = f * c + i * gg
        return o * jnp.tanh(c), c

    h = jnp.zeros((B, H)); c = jnp.zeros((B, H))
    h, c = cell(a_feat, h, c)

    def scan_fn(carry, x_t):
        h, c = carry
        h, c = cell(x_t, h, c)
        return (h, c), h @ params["w_cls"].T

    _, outs = lax.scan(scan_fn, (h, c), jnp.transpose(x, (1, 0, 2)))
    outs = jnp.transpose(outs, (1, 0, 2))                            # (B, T, V)

    max_len = T - 1
    nzeros = jnp.sum((questions == 0).astype(jnp.int32), axis=1)
    lengths = jnp.minimum(max_len, (max_len - nzeros) + 1)
    mask = (jnp.arange(T)[None, :] < lengths[:, None]).astype(jnp.float32)
    return outs * mask[:, :, None]


# ----------------------------- main -------------------------------------------
if __name__ == "__main__":
    B, T = 2, 8
    key = jax.random.PRNGKey(0)
    k = jax.random.split(key, 8)

    bound = 1.0 / (DIM_H ** 0.5)
    params = {
        "embed": jax.random.uniform(k[0], (VOCAB, DIM_E), jnp.float32, -0.25, 0.25),
        "w_ih": jax.random.uniform(k[1], (4 * DIM_H, DIN), jnp.float32, -bound, bound),
        "w_hh": jax.random.uniform(k[2], (4 * DIM_H, DIM_H), jnp.float32, -bound, bound),
        "b_ih": jax.random.uniform(k[3], (4 * DIM_H,), jnp.float32, -bound, bound),
        "b_hh": jax.random.uniform(k[4], (4 * DIM_H,), jnp.float32, -bound, bound),
        "w_cls": jax.random.uniform(k[5], (VOCAB, DIM_H), jnp.float32, -bound, bound),
    }

    v_feat = jax.random.normal(k[6], (B, DIM_V), jnp.float32)
    a_feat = jax.random.normal(k[7], (B, DIN), jnp.float32)
    questions = jnp.array(
        [[3, 5, 7, 2, 1, 0, 0, 0],
         [4, 9, 2, 0, 0, 0, 0, 0]], dtype=jnp.int32)

    pred = question_gen_forward(v_feat, a_feat, questions, params)
    pred = jax.block_until_ready(pred)

    ref = reference_forward(v_feat, a_feat, questions, params)
    assert pred.shape == (B, T, VOCAB)
    # bf16 MXU operands (f32 accumulation) -> tolerance relaxed vs. the f32 reference
    assert jnp.allclose(pred, ref, atol=5e-2, rtol=5e-2), "mismatch vs reference"

    print("KERNEL_OK")
</pallas_src>

<mosaic_0001>
module attributes {stable_mosaic.version = 11 : i64} {
  func.func @kernel(%arg0: memref<72x32xbf16, #tpu.memory_space<vmem>>, %arg1: memref<8x1xf32, #tpu.memory_space<vmem>>, %arg2: memref<32x128xbf16, #tpu.memory_space<vmem>>, %arg3: memref<32x128xbf16, #tpu.memory_space<vmem>>, %arg4: memref<1x128xf32, #tpu.memory_space<vmem>>, %arg5: memref<32x128xbf16, #tpu.memory_space<vmem>>, %arg6: memref<64x128xf32, #tpu.memory_space<vmem>>, %arg7: memref<64x32xf32, #tpu.memory_space<vmem>>) attributes {dimension_semantics = [], scalar_prefetch = 0 : i64, scratch_operands = 1 : i64, tpu.core_type = #tpu.core_type<tc>} {
    %c0 = arith.constant 0 : index
    %c0_0 = arith.constant 0 : index
    %0 = vector.load %arg2[%c0, %c0_0] : memref<32x128xbf16, #tpu.memory_space<vmem>>, vector<32x128xbf16>
    %c0_1 = arith.constant 0 : index
    %c0_2 = arith.constant 0 : index
    %1 = vector.load %arg3[%c0_1, %c0_2] : memref<32x128xbf16, #tpu.memory_space<vmem>>, vector<32x128xbf16>
    %c0_3 = arith.constant 0 : index
    %c0_4 = arith.constant 0 : index
    %2 = vector.load %arg4[%c0_3, %c0_4] : memref<1x128xf32, #tpu.memory_space<vmem>>, vector<1x128xf32>
    %c0_5 = arith.constant 0 : index
    %c0_6 = arith.constant 0 : index
    %3 = vector.load %arg1[%c0_5, %c0_6] : memref<8x1xf32, #tpu.memory_space<vmem>>, vector<8x1xf32>
    %c0_7 = arith.constant 0 : index
    %c0_8 = arith.constant 0 : index
    %4 = vector.load %arg0[%c0_7, %c0_8] : memref<72x32xbf16, #tpu.memory_space<vmem>>, vector<72x32xbf16>
    %cst = arith.constant dense<0.000000e+00> : vector<72x128xf32>
    %5 = tpu.matmul %4, %0, %cst {dimension_numbers = #tpu.dot_dimension_numbers<[1], [0], [0], [1], [0, 0, 1, 1], [], []>} : vector<72x32xbf16>, vector<32x128xbf16>, vector<72x128xf32> -> vector<72x128xf32>
    %6 = vector.broadcast %2 : vector<1x128xf32> to vector<72x128xf32>
    %7 = arith.addf %5, %6 : vector<72x128xf32>
    %8 = vector.extract_strided_slice %7 {offsets = [0, 0], sizes = [8, 128], strides = [1, 1]} : vector<72x128xf32> to vector<8x128xf32>
    %9 = arith.negf %8 : vector<8x128xf32>
    %10 = math.exp %9 : vector<8x128xf32>
    %cst_9 = arith.constant 1.000000e+00 : f32
    %11 = vector.broadcast %cst_9 : f32 to vector<8x128xf32>
    %12 = arith.addf %11, %10 : vector<8x128xf32>
    %13 = arith.divf %11, %12 : vector<8x128xf32>
    %14 = vector.extract_strided_slice %13 {offsets = [0, 0], sizes = [8, 32], strides = [1, 1]} : vector<8x128xf32> to vector<8x32xf32>
    %15 = vector.extract_strided_slice %13 {offsets = [0, 64], sizes = [8, 32], strides = [1, 1]} : vector<8x128xf32> to vector<8x32xf32>
    %cst_10 = arith.constant 2.000000e+00 : f32
    %16 = vector.broadcast %cst_10 : f32 to vector<8x32xf32>
    %17 = arith.mulf %16, %15 : vector<8x32xf32>
    %cst_11 = arith.constant 1.000000e+00 : f32
    %18 = vector.broadcast %cst_11 : f32 to vector<8x32xf32>
    %19 = arith.subf %17, %18 : vector<8x32xf32>
    %20 = arith.mulf %14, %19 : vector<8x32xf32>
    %21 = vector.extract_strided_slice %13 {offsets = [0, 96], sizes = [8, 32], strides = [1, 1]} : vector<8x128xf32> to vector<8x32xf32>
    %22 = math.tanh %20 : vector<8x32xf32>
    %23 = arith.mulf %21, %22 : vector<8x32xf32>
    %24 = vector.extract_strided_slice %7 {offsets = [8, 0], sizes = [8, 128], strides = [1, 1]} : vector<72x128xf32> to vector<8x128xf32>
    %25 = arith.truncf %23 : vector<8x32xf32> to vector<8x32xbf16>
    %cst_12 = arith.constant dense<0.000000e+00> : vector<8x128xf32>
    %26 = tpu.matmul %25, %1, %cst_12 {dimension_numbers = #tpu.dot_dimension_numbers<[1], [0], [0], [1], [0, 0, 1, 1], [], []>} : vector<8x32xbf16>, vector<32x128xbf16>, vector<8x128xf32> -> vector<8x128xf32>
    %27 = arith.addf %24, %26 : vector<8x128xf32>
    %28 = arith.negf %27 : vector<8x128xf32>
    %29 = math.exp %28 : vector<8x128xf32>
    %cst_13 = arith.constant 1.000000e+00 : f32
    %30 = vector.broadcast %cst_13 : f32 to vector<8x128xf32>
    %31 = arith.addf %30, %29 : vector<8x128xf32>
    %32 = arith.divf %30, %31 : vector<8x128xf32>
    %33 = vector.extract_strided_slice %32 {offsets = [0, 32], sizes = [8, 32], strides = [1, 1]} : vector<8x128xf32> to vector<8x32xf32>
    %34 = arith.mulf %33, %20 : vector<8x32xf32>
    %35 = vector.extract_strided_slice %32 {offsets = [0, 0], sizes = [8, 32], strides = [1, 1]} : vector<8x128xf32> to vector<8x32xf32>
    %36 = vector.extract_strided_slice %32 {offsets = [0, 64], sizes = [8, 32], strides = [1, 1]} : vector<8x128xf32> to vector<8x32xf32>
    %cst_14 = arith.constant 2.000000e+00 : f32
    %37 = vector.broadcast %cst_14 : f32 to vector<8x32xf32>
    %38 = arith.mulf %37, %36 : vector<8x32xf32>
    %cst_15 = arith.constant 1.000000e+00 : f32
    %39 = vector.broadcast %cst_15 : f32 to vector<8x32xf32>
    %40 = arith.subf %38, %39 : vector<8x32xf32>
    %41 = arith.mulf %35, %40 : vector<8x32xf32>
    %42 = arith.addf %34, %41 : vector<8x32xf32>
    %43 = vector.extract_strided_slice %32 {offsets = [0, 96], sizes = [8, 32], strides = [1, 1]} : vector<8x128xf32> to vector<8x32xf32>
    %44 = math.tanh %42 : vector<8x32xf32>
    %45 = arith.mulf %43, %44 : vector<8x32xf32>
    %cst_16 = arith.constant 0.000000e+00 : f32
    %46 = vector.broadcast %cst_16 : f32 to vector<8x1xf32>
    %47 = arith.cmpf ogt, %3, %46 : vector<8x1xf32>
    %48 = arith.extui %47 : vector<8x1xi1> to vector<8x1xi32>
    %49 = arith.sitofp %48 : vector<8x1xi32> to vector<8x1xf32>
    %50 = vector.broadcast %49 : vector<8x1xf32> to vector<8x32xf32>
    %51 = arith.mulf %45, %50 : vector<8x32xf32>
    %c0_17 = arith.constant 0 : index
    %c0_18 = arith.constant 0 : index
    %52 = vector.load %arg7[%c0_17, %c0_18] : memref<64x32xf32, #tpu.memory_space<vmem>>, vector<8x32xf32>
    tpu.vector_store %arg7[%c0_17, %c0_18], %51 {strides = array<i32>} : memref<64x32xf32, #tpu.memory_space<vmem>>, vector<8x32xf32>,
    %53 = vector.extract_strided_slice %7 {offsets = [16, 0], sizes = [8, 128], strides = [1, 1]} : vector<72x128xf32> to vector<8x128xf32>
    %54 = arith.truncf %45 : vector<8x32xf32> to vector<8x32xbf16>
    %cst_19 = arith.constant dense<0.000000e+00> : vector<8x128xf32>
    %55 = tpu.matmul %54, %1, %cst_19 {dimension_numbers = #tpu.dot_dimension_numbers<[1], [0], [0], [1], [0, 0, 1, 1], [], []>} : vector<8x32xbf16>, vector<32x128xbf16>, vector<8x128xf32> -> vector<8x128xf32>
    %56 = arith.addf %53, %55 : vector<8x128xf32>
    %57 = arith.negf %56 : vector<8x128xf32>
    %58 = math.exp %57 : vector<8x128xf32>
    %cst_20 = arith.constant 1.000000e+00 : f32
    %59 = vector.broadcast %cst_20 : f32 to vector<8x128xf32>
    %60 = arith.addf %59, %58 : vector<8x128xf32>
    %61 = arith.divf %59, %60 : vector<8x128xf32>
    %62 = vector.extract_strided_slice %61 {offsets = [0, 32], sizes = [8, 32], strides = [1, 1]} : vector<8x128xf32> to vector<8x32xf32>
    %63 = arith.mulf %62, %42 : vector<8x32xf32>
    %64 = vector.extract_strided_slice %61 {offsets = [0, 0], sizes = [8, 32], strides = [1, 1]} : vector<8x128xf32> to vector<8x32xf32>
    %65 = vector.extract_strided_slice %61 {offsets = [0, 64], sizes = [8, 32], strides = [1, 1]} : vector<8x128xf32> to vector<8x32xf32>
    %cst_21 = arith.constant 2.000000e+00 : f32
    %66 = vector.broadcast %cst_21 : f32 to vector<8x32xf32>
    %67 = arith.mulf %66, %65 : vector<8x32xf32>
    %cst_22 = arith.constant 1.000000e+00 : f32
    %68 = vector.broadcast %cst_22 : f32 to vector<8x32xf32>
    %69 = arith.subf %67, %68 : vector<8x32xf32>
    %70 = arith.mulf %64, %69 : vector<8x32xf32>
    %71 = arith.addf %63, %70 : vector<8x32xf32>
    %72 = vector.extract_strided_slice %61 {offsets = [0, 96], sizes = [8, 32], strides = [1, 1]} : vector<8x128xf32> to vector<8x32xf32>
    %73 = math.tanh %71 : vector<8x32xf32>
    %74 = arith.mulf %72, %73 : vector<8x32xf32>
    %cst_23 = arith.constant 1.000000e+00 : f32
    %75 = vector.broadcast %cst_23 : f32 to vector<8x1xf32>
    %76 = arith.cmpf ogt, %3, %75 : vector<8x1xf32>
    %77 = arith.extui %76 : vector<8x1xi1> to vector<8x1xi32>
    %78 = arith.sitofp %77 : vector<8x1xi32> to vector<8x1xf32>
    %79 = vector.broadcast %78 : vector<8x1xf32> to vector<8x32xf32>
    %80 = arith.mulf %74, %79 : vector<8x32xf32>
    %c8 = arith.constant 8 : index
    %c0_24 = arith.constant 0 : index
    %81 = vector.load %arg7[%c8, %c0_24] : memref<64x32xf32, #tpu.memory_space<vmem>>, vector<8x32xf32>
    tpu.vector_store %arg7[%c8, %c0_24], %80 {strides = array<i32>} : memref<64x32xf32, #tpu.memory_space<vmem>>, vector<8x32xf32>,
    %82 = vector.extract_strided_slice %7 {offsets = [24, 0], sizes = [8, 128], strides = [1, 1]} : vector<72x128xf32> to vector<8x128xf32>
    %83 = arith.truncf %74 : vector<8x32xf32> to vector<8x32xbf16>
    %cst_25 = arith.constant dense<0.000000e+00> : vector<8x128xf32>
    %84 = tpu.matmul %83, %1, %cst_25 {dimension_numbers = #tpu.dot_dimension_numbers<[1], [0], [0], [1], [0, 0, 1, 1], [], []>} : vector<8x32xbf16>, vector<32x128xbf16>, vector<8x128xf32> -> vector<8x128xf32>
    %85 = arith.addf %82, %84 : vector<8x128xf32>
    %86 = arith.negf %85 : vector<8x128xf32>
    %87 = math.exp %86 : vector<8x128xf32>
    %cst_26 = arith.constant 1.000000e+00 : f32
    %88 = vector.broadcast %cst_26 : f32 to vector<8x128xf32>
    %89 = arith.addf %88, %87 : vector<8x128xf32>
    %90 = arith.divf %88, %89 : vector<8x128xf32>
    %91 = vector.extract_strided_slice %90 {offsets = [0, 32], sizes = [8, 32], strides = [1, 1]} : vector<8x128xf32> to vector<8x32xf32>
    %92 = arith.mulf %91, %71 : vector<8x32xf32>
    %93 = vector.extract_strided_slice %90 {offsets = [0, 0], sizes = [8, 32], strides = [1, 1]} : vector<8x128xf32> to vector<8x32xf32>
    %94 = vector.extract_strided_slice %90 {offsets = [0, 64], sizes = [8, 32], strides = [1, 1]} : vector<8x128xf32> to vector<8x32xf32>
    %cst_27 = arith.constant 2.000000e+00 : f32
    %95 = vector.broadcast %cst_27 : f32 to vector<8x32xf32>
    %96 = arith.mulf %95, %94 : vector<8x32xf32>
    %cst_28 = arith.constant 1.000000e+00 : f32
    %97 = vector.broadcast %cst_28 : f32 to vector<8x32xf32>
    %98 = arith.subf %96, %97 : vector<8x32xf32>
    %99 = arith.mulf %93, %98 : vector<8x32xf32>
    %100 = arith.addf %92, %99 : vector<8x32xf32>
    %101 = vector.extract_strided_slice %90 {offsets = [0, 96], sizes = [8, 32], strides = [1, 1]} : vector<8x128xf32> to vector<8x32xf32>
    %102 = math.tanh %100 : vector<8x32xf32>
    %103 = arith.mulf %101, %102 : vector<8x32xf32>
    %cst_29 = arith.constant 2.000000e+00 : f32
    %104 = vector.broadcast %cst_29 : f32 to vector<8x1xf32>
    %105 = arith.cmpf ogt, %3, %104 : vector<8x1xf32>
    %106 = arith.extui %105 : vector<8x1xi1> to vector<8x1xi32>
    %107 = arith.sitofp %106 : vector<8x1xi32> to vector<8x1xf32>
    %108 = vector.broadcast %107 : vector<8x1xf32> to vector<8x32xf32>
    %109 = arith.mulf %103, %108 : vector<8x32xf32>
    %c16 = arith.constant 16 : index
    %c0_30 = arith.constant 0 : index
    %110 = vector.load %arg7[%c16, %c0_30] : memref<64x32xf32, #tpu.memory_space<vmem>>, vector<8x32xf32>
    tpu.vector_store %arg7[%c16, %c0_30], %109 {strides = array<i32>} : memref<64x32xf32, #tpu.memory_space<vmem>>, vector<8x32xf32>,
    %111 = vector.extract_strided_slice %7 {offsets = [32, 0], sizes = [8, 128], strides = [1, 1]} : vector<72x128xf32> to vector<8x128xf32>
    %112 = arith.truncf %103 : vector<8x32xf32> to vector<8x32xbf16>
    %cst_31 = arith.constant dense<0.000000e+00> : vector<8x128xf32>
    %113 = tpu.matmul %112, %1, %cst_31 {dimension_numbers = #tpu.dot_dimension_numbers<[1], [0], [0], [1], [0, 0, 1, 1], [], []>} : vector<8x32xbf16>, vector<32x128xbf16>, vector<8x128xf32> -> vector<8x128xf32>
    %114 = arith.addf %111, %113 : vector<8x128xf32>
    %115 = arith.negf %114 : vector<8x128xf32>
    %116 = math.exp %115 : vector<8x128xf32>
    %cst_32 = arith.constant 1.000000e+00 : f32
    %117 = vector.broadcast %cst_32 : f32 to vector<8x128xf32>
    %118 = arith.addf %117, %116 : vector<8x128xf32>
    %119 = arith.divf %117, %118 : vector<8x128xf32>
    %120 = vector.extract_strided_slice %119 {offsets = [0, 32], sizes = [8, 32], strides = [1, 1]} : vector<8x128xf32> to vector<8x32xf32>
    %121 = arith.mulf %120, %100 : vector<8x32xf32>
    %122 = vector.extract_strided_slice %119 {offsets = [0, 0], sizes = [8, 32], strides = [1, 1]} : vector<8x128xf32> to vector<8x32xf32>
    %123 = vector.extract_strided_slice %119 {offsets = [0, 64], sizes = [8, 32], strides = [1, 1]} : vector<8x128xf32> to vector<8x32xf32>
    %cst_33 = arith.constant 2.000000e+00 : f32
    %124 = vector.broadcast %cst_33 : f32 to vector<8x32xf32>
    %125 = arith.mulf %124, %123 : vector<8x32xf32>
    %cst_34 = arith.constant 1.000000e+00 : f32
    %126 = vector.broadcast %cst_34 : f32 to vector<8x32xf32>
    %127 = arith.subf %125, %126 : vector<8x32xf32>
    %128 = arith.mulf %122, %127 : vector<8x32xf32>
    %129 = arith.addf %121, %128 : vector<8x32xf32>
    %130 = vector.extract_strided_slice %119 {offsets = [0, 96], sizes = [8, 32], strides = [1, 1]} : vector<8x128xf32> to vector<8x32xf32>
    %131 = math.tanh %129 : vector<8x32xf32>
    %132 = arith.mulf %130, %131 : vector<8x32xf32>
    %cst_35 = arith.constant 3.000000e+00 : f32
    %133 = vector.broadcast %cst_35 : f32 to vector<8x1xf32>
    %134 = arith.cmpf ogt, %3, %133 : vector<8x1xf32>
    %135 = arith.extui %134 : vector<8x1xi1> to vector<8x1xi32>
    %136 = arith.sitofp %135 : vector<8x1xi32> to vector<8x1xf32>
    %137 = vector.broadcast %136 : vector<8x1xf32> to vector<8x32xf32>
    %138 = arith.mulf %132, %137 : vector<8x32xf32>
    %c24 = arith.constant 24 : index
    %c0_36 = arith.constant 0 : index
    %139 = vector.load %arg7[%c24, %c0_36] : memref<64x32xf32, #tpu.memory_space<vmem>>, vector<8x32xf32>
    tpu.vector_store %arg7[%c24, %c0_36], %138 {strides = array<i32>} : memref<64x32xf32, #tpu.memory_space<vmem>>, vector<8x32xf32>,
    %140 = vector.extract_strided_slice %7 {offsets = [40, 0], sizes = [8, 128], strides = [1, 1]} : vector<72x128xf32> to vector<8x128xf32>
    %141 = arith.truncf %132 : vector<8x32xf32> to vector<8x32xbf16>
    %cst_37 = arith.constant dense<0.000000e+00> : vector<8x128xf32>
    %142 = tpu.matmul %141, %1, %cst_37 {dimension_numbers = #tpu.dot_dimension_numbers<[1], [0], [0], [1], [0, 0, 1, 1], [], []>} : vector<8x32xbf16>, vector<32x128xbf16>, vector<8x128xf32> -> vector<8x128xf32>
    %143 = arith.addf %140, %142 : vector<8x128xf32>
    %144 = arith.negf %143 : vector<8x128xf32>
    %145 = math.exp %144 : vector<8x128xf32>
    %cst_38 = arith.constant 1.000000e+00 : f32
    %146 = vector.broadcast %cst_38 : f32 to vector<8x128xf32>
    %147 = arith.addf %146, %145 : vector<8x128xf32>
    %148 = arith.divf %146, %147 : vector<8x128xf32>
    %149 = vector.extract_strided_slice %148 {offsets = [0, 32], sizes = [8, 32], strides = [1, 1]} : vector<8x128xf32> to vector<8x32xf32>
    %150 = arith.mulf %149, %129 : vector<8x32xf32>
    %151 = vector.extract_strided_slice %148 {offsets = [0, 0], sizes = [8, 32], strides = [1, 1]} : vector<8x128xf32> to vector<8x32xf32>
    %152 = vector.extract_strided_slice %148 {offsets = [0, 64], sizes = [8, 32], strides = [1, 1]} : vector<8x128xf32> to vector<8x32xf32>
    %cst_39 = arith.constant 2.000000e+00 : f32
    %153 = vector.broadcast %cst_39 : f32 to vector<8x32xf32>
    %154 = arith.mulf %153, %152 : vector<8x32xf32>
    %cst_40 = arith.constant 1.000000e+00 : f32
    %155 = vector.broadcast %cst_40 : f32 to vector<8x32xf32>
    %156 = arith.subf %154, %155 : vector<8x32xf32>
    %157 = arith.mulf %151, %156 : vector<8x32xf32>
    %158 = arith.addf %150, %157 : vector<8x32xf32>
    %159 = vector.extract_strided_slice %148 {offsets = [0, 96], sizes = [8, 32], strides = [1, 1]} : vector<8x128xf32> to vector<8x32xf32>
    %160 = math.tanh %158 : vector<8x32xf32>
    %161 = arith.mulf %159, %160 : vector<8x32xf32>
    %cst_41 = arith.constant 4.000000e+00 : f32
    %162 = vector.broadcast %cst_41 : f32 to vector<8x1xf32>
    %163 = arith.cmpf ogt, %3, %162 : vector<8x1xf32>
    %164 = arith.extui %163 : vector<8x1xi1> to vector<8x1xi32>
    %165 = arith.sitofp %164 : vector<8x1xi32> to vector<8x1xf32>
    %166 = vector.broadcast %165 : vector<8x1xf32> to vector<8x32xf32>
    %167 = arith.mulf %161, %166 : vector<8x32xf32>
    %c32 = arith.constant 32 : index
    %c0_42 = arith.constant 0 : index
    %168 = vector.load %arg7[%c32, %c0_42] : memref<64x32xf32, #tpu.memory_space<vmem>>, vector<8x32xf32>
    tpu.vector_store %arg7[%c32, %c0_42], %167 {strides = array<i32>} : memref<64x32xf32, #tpu.memory_space<vmem>>, vector<8x32xf32>,
    %169 = vector.extract_strided_slice %7 {offsets = [48, 0], sizes = [8, 128], strides = [1, 1]} : vector<72x128xf32> to vector<8x128xf32>
    %170 = arith.truncf %161 : vector<8x32xf32> to vector<8x32xbf16>
    %cst_43 = arith.constant dense<0.000000e+00> : vector<8x128xf32>
    %171 = tpu.matmul %170, %1, %cst_43 {dimension_numbers = #tpu.dot_dimension_numbers<[1], [0], [0], [1], [0, 0, 1, 1], [], []>} : vector<8x32xbf16>, vector<32x128xbf16>, vector<8x128xf32> -> vector<8x128xf32>
    %172 = arith.addf %169, %171 : vector<8x128xf32>
    %173 = arith.negf %172 : vector<8x128xf32>
    %174 = math.exp %173 : vector<8x128xf32>
    %cst_44 = arith.constant 1.000000e+00 : f32
    %175 = vector.broadcast %cst_44 : f32 to vector<8x128xf32>
    %176 = arith.addf %175, %174 : vector<8x128xf32>
    %177 = arith.divf %175, %176 : vector<8x128xf32>
    %178 = vector.extract_strided_slice %177 {offsets = [0, 32], sizes = [8, 32], strides = [1, 1]} : vector<8x128xf32> to vector<8x32xf32>
    %179 = arith.mulf %178, %158 : vector<8x32xf32>
    %180 = vector.extract_strided_slice %177 {offsets = [0, 0], sizes = [8, 32], strides = [1, 1]} : vector<8x128xf32> to vector<8x32xf32>
    %181 = vector.extract_strided_slice %177 {offsets = [0, 64], sizes = [8, 32], strides = [1, 1]} : vector<8x128xf32> to vector<8x32xf32>
    %cst_45 = arith.constant 2.000000e+00 : f32
    %182 = vector.broadcast %cst_45 : f32 to vector<8x32xf32>
    %183 = arith.mulf %182, %181 : vector<8x32xf32>
    %cst_46 = arith.constant 1.000000e+00 : f32
    %184 = vector.broadcast %cst_46 : f32 to vector<8x32xf32>
    %185 = arith.subf %183, %184 : vector<8x32xf32>
    %186 = arith.mulf %180, %185 : vector<8x32xf32>
    %187 = arith.addf %179, %186 : vector<8x32xf32>
    %188 = vector.extract_strided_slice %177 {offsets = [0, 96], sizes = [8, 32], strides = [1, 1]} : vector<8x128xf32> to vector<8x32xf32>
    %189 = math.tanh %187 : vector<8x32xf32>
    %190 = arith.mulf %188, %189 : vector<8x32xf32>
    %cst_47 = arith.constant 5.000000e+00 : f32
    %191 = vector.broadcast %cst_47 : f32 to vector<8x1xf32>
    %192 = arith.cmpf ogt, %3, %191 : vector<8x1xf32>
    %193 = arith.extui %192 : vector<8x1xi1> to vector<8x1xi32>
    %194 = arith.sitofp %193 : vector<8x1xi32> to vector<8x1xf32>
    %195 = vector.broadcast %194 : vector<8x1xf32> to vector<8x32xf32>
    %196 = arith.mulf %190, %195 : vector<8x32xf32>
    %c40 = arith.constant 40 : index
    %c0_48 = arith.constant 0 : index
    %197 = vector.load %arg7[%c40, %c0_48] : memref<64x32xf32, #tpu.memory_space<vmem>>, vector<8x32xf32>
    tpu.vector_store %arg7[%c40, %c0_48], %196 {strides = array<i32>} : memref<64x32xf32, #tpu.memory_space<vmem>>, vector<8x32xf32>,
    %198 = vector.extract_strided_slice %7 {offsets = [56, 0], sizes = [8, 128], strides = [1, 1]} : vector<72x128xf32> to vector<8x128xf32>
    %199 = arith.truncf %190 : vector<8x32xf32> to vector<8x32xbf16>
    %cst_49 = arith.constant dense<0.000000e+00> : vector<8x128xf32>
    %200 = tpu.matmul %199, %1, %cst_49 {dimension_numbers = #tpu.dot_dimension_numbers<[1], [0], [0], [1], [0, 0, 1, 1], [], []>} : vector<8x32xbf16>, vector<32x128xbf16>, vector<8x128xf32> -> vector<8x128xf32>
    %201 = arith.addf %198, %200 : vector<8x128xf32>
    %202 = arith.negf %201 : vector<8x128xf32>
    %203 = math.exp %202 : vector<8x128xf32>
    %cst_50 = arith.constant 1.000000e+00 : f32
    %204 = vector.broadcast %cst_50 : f32 to vector<8x128xf32>
    %205 = arith.addf %204, %203 : vector<8x128xf32>
    %206 = arith.divf %204, %205 : vector<8x128xf32>
    %207 = vector.extract_strided_slice %206 {offsets = [0, 32], sizes = [8, 32], strides = [1, 1]} : vector<8x128xf32> to vector<8x32xf32>
    %208 = arith.mulf %207, %187 : vector<8x32xf32>
    %209 = vector.extract_strided_slice %206 {offsets = [0, 0], sizes = [8, 32], strides = [1, 1]} : vector<8x128xf32> to vector<8x32xf32>
    %210 = vector.extract_strided_slice %206 {offsets = [0, 64], sizes = [8, 32], strides = [1, 1]} : vector<8x128xf32> to vector<8x32xf32>
    %cst_51 = arith.constant 2.000000e+00 : f32
    %211 = vector.broadcast %cst_51 : f32 to vector<8x32xf32>
    %212 = arith.mulf %211, %210 : vector<8x32xf32>
    %cst_52 = arith.constant 1.000000e+00 : f32
    %213 = vector.broadcast %cst_52 : f32 to vector<8x32xf32>
    %214 = arith.subf %212, %213 : vector<8x32xf32>
    %215 = arith.mulf %209, %214 : vector<8x32xf32>
    %216 = arith.addf %208, %215 : vector<8x32xf32>
    %217 = vector.extract_strided_slice %206 {offsets = [0, 96], sizes = [8, 32], strides = [1, 1]} : vector<8x128xf32> to vector<8x32xf32>
    %218 = math.tanh %216 : vector<8x32xf32>
    %219 = arith.mulf %217, %218 : vector<8x32xf32>
    %cst_53 = arith.constant 6.000000e+00 : f32
    %220 = vector.broadcast %cst_53 : f32 to vector<8x1xf32>
    %221 = arith.cmpf ogt, %3, %220 : vector<8x1xf32>
    %222 = arith.extui %221 : vector<8x1xi1> to vector<8x1xi32>
    %223 = arith.sitofp %222 : vector<8x1xi32> to vector<8x1xf32>
    %224 = vector.broadcast %223 : vector<8x1xf32> to vector<8x32xf32>
    %225 = arith.mulf %219, %224 : vector<8x32xf32>
    %c48 = arith.constant 48 : index
    %c0_54 = arith.constant 0 : index
    %226 = vector.load %arg7[%c48, %c0_54] : memref<64x32xf32, #tpu.memory_space<vmem>>, vector<8x32xf32>
    tpu.vector_store %arg7[%c48, %c0_54], %225 {strides = array<i32>} : memref<64x32xf32, #tpu.memory_space<vmem>>, vector<8x32xf32>,
    %227 = vector.extract_strided_slice %7 {offsets = [64, 0], sizes = [8, 128], strides = [1, 1]} : vector<72x128xf32> to vector<8x128xf32>
    %228 = arith.truncf %219 : vector<8x32xf32> to vector<8x32xbf16>
    %cst_55 = arith.constant dense<0.000000e+00> : vector<8x128xf32>
    %229 = tpu.matmul %228, %1, %cst_55 {dimension_numbers = #tpu.dot_dimension_numbers<[1], [0], [0], [1], [0, 0, 1, 1], [], []>} : vector<8x32xbf16>, vector<32x128xbf16>, vector<8x128xf32> -> vector<8x128xf32>
    %230 = arith.addf %227, %229 : vector<8x128xf32>
    %231 = arith.negf %230 : vector<8x128xf32>
    %232 = math.exp %231 : vector<8x128xf32>
    %cst_56 = arith.constant 1.000000e+00 : f32
    %233 = vector.broadcast %cst_56 : f32 to vector<8x128xf32>
    %234 = arith.addf %233, %232 : vector<8x128xf32>
    %235 = arith.divf %233, %234 : vector<8x128xf32>
    %236 = vector.extract_strided_slice %235 {offsets = [0, 32], sizes = [8, 32], strides = [1, 1]} : vector<8x128xf32> to vector<8x32xf32>
    %237 = arith.mulf %236, %216 : vector<8x32xf32>
    %238 = vector.extract_strided_slice %235 {offsets = [0, 0], sizes = [8, 32], strides = [1, 1]} : vector<8x128xf32> to vector<8x32xf32>
    %239 = vector.extract_strided_slice %235 {offsets = [0, 64], sizes = [8, 32], strides = [1, 1]} : vector<8x128xf32> to vector<8x32xf32>
    %cst_57 = arith.constant 2.000000e+00 : f32
    %240 = vector.broadcast %cst_57 : f32 to vector<8x32xf32>
    %241 = arith.mulf %240, %239 : vector<8x32xf32>
    %cst_58 = arith.constant 1.000000e+00 : f32
    %242 = vector.broadcast %cst_58 : f32 to vector<8x32xf32>
    %243 = arith.subf %241, %242 : vector<8x32xf32>
    %244 = arith.mulf %238, %243 : vector<8x32xf32>
    %245 = arith.addf %237, %244 : vector<8x32xf32>
    %246 = vector.extract_strided_slice %235 {offsets = [0, 96], sizes = [8, 32], strides = [1, 1]} : vector<8x128xf32> to vector<8x32xf32>
    %247 = math.tanh %245 : vector<8x32xf32>
    %248 = arith.mulf %246, %247 : vector<8x32xf32>
    %cst_59 = arith.constant 7.000000e+00 : f32
    %249 = vector.broadcast %cst_59 : f32 to vector<8x1xf32>
    %250 = arith.cmpf ogt, %3, %249 : vector<8x1xf32>
    %251 = arith.extui %250 : vector<8x1xi1> to vector<8x1xi32>
    %252 = arith.sitofp %251 : vector<8x1xi32> to vector<8x1xf32>
    %253 = vector.broadcast %252 : vector<8x1xf32> to vector<8x32xf32>
    %254 = arith.mulf %248, %253 : vector<8x32xf32>
    %c56 = arith.constant 56 : index
    %c0_60 = arith.constant 0 : index
    %255 = vector.load %arg7[%c56, %c0_60] : memref<64x32xf32, #tpu.memory_space<vmem>>, vector<8x32xf32>
    tpu.vector_store %arg7[%c56, %c0_60], %254 {strides = array<i32>} : memref<64x32xf32, #tpu.memory_space<vmem>>, vector<8x32xf32>,
    %c0_61 = arith.constant 0 : index
    %c0_62 = arith.constant 0 : index
    %256 = vector.load %arg7[%c0_61, %c0_62] : memref<64x32xf32, #tpu.memory_space<vmem>>, vector<64x32xf32>
    %257 = arith.truncf %256 : vector<64x32xf32> to vector<64x32xbf16>
    %c0_63 = arith.constant 0 : index
    %c0_64 = arith.constant 0 : index
    %258 = vector.load %arg5[%c0_63, %c0_64] : memref<32x128xbf16, #tpu.memory_space<vmem>>, vector<32x128xbf16>
    %cst_65 = arith.constant dense<0.000000e+00> : vector<64x128xf32>
    %259 = tpu.matmul %257, %258, %cst_65 {dimension_numbers = #tpu.dot_dimension_numbers<[1], [0], [0], [1], [0, 0, 1, 1], [], []>} : vector<64x32xbf16>, vector<32x128xbf16>, vector<64x128xf32> -> vector<64x128xf32>
    %c0_66 = arith.constant 0 : index
    %c0_67 = arith.constant 0 : index
    %260 = vector.load %arg6[%c0_66, %c0_67] : memref<64x128xf32, #tpu.memory_space<vmem>>, vector<64x128xf32>
    tpu.vector_store %arg6[%c0_66, %c0_67], %259 {strides = array<i32>} : memref<64x128xf32, #tpu.memory_space<vmem>>, vector<64x128xf32>,
    return
  }
}

</mosaic_0001>

<llo_original>
// kernel: question_gen_forward.1
$region0: #{question_gen_forward.1}
  #allocation0 [shape = 'u32[]', space=smem, size = 0x4, offset = 0x4, fixed_abs, tag = 'smem constant byte address 0x4 - core index']
  #allocation1 [shape = 'u32[144,128]{1,0:T(1,128)}', space=vmem, size = 0x12000, scoped, tag = 'internal scratch']
  #allocation2 [shape = 'f32[64,32]{1,0:T(8,128)}', space=vmem, size = 0x8000, scoped, tag = 'scratch operand']
  %s0 = inlined_call_operand.vmem [shape: bf16[72,32], index: 0, kind: input, shape index: {}]
  %s1 = inlined_call_operand.vmem [shape: f32[8,1], index: 1, kind: input, shape index: {}]
  %s2 = inlined_call_operand.vmem [shape: bf16[32,128], index: 2, kind: input, shape index: {}]
  %s3 = inlined_call_operand.vmem [shape: bf16[32,128], index: 3, kind: input, shape index: {}]
  %s4 = inlined_call_operand.vmem [shape: f32[1,128], index: 4, kind: input, shape index: {}]
  %s5 = inlined_call_operand.vmem [shape: bf16[32,128], index: 5, kind: input, shape index: {}]
  %s6 = inlined_call_operand.vmem [shape: f32[64,128], index: 6, kind: output, shape index: {}]
  %s7 = sld [smem:[#allocation0]]
  $region34: #{question_gen_forward.1} parent=0
    _
  %s9 = ssub.s32 1, %s7
  %s10 = scalar_select 0, %s9, %s7
  // Predicated region
  $region2: #{question_gen_forward.1} parent=0 // pred_check
    _
  $region3: #{question_gen_forward.1} parent=0 // pred_check_branch
    %12 = sbr.rel (0) target = $region5
  $region4: #{question_gen_forward.1} parent=0 // pred_region
    _
  $region5: #{question_gen_forward.1} parent=0 // pred_fallthru
    _
  // Predicated region
  $region6: #{question_gen_forward.1} parent=0 // pred_check
    _
  $region7: #{question_gen_forward.1} parent=0 // pred_check_branch
    %14 = sbr.rel (0) target = $region9
  $region8: #{question_gen_forward.1} parent=0 // pred_region
    _
  $region9: #{question_gen_forward.1} parent=0 // pred_fallthru
    _
  // Predicated region
  $region10: #{question_gen_forward.1} parent=0 // pred_check
    _
  $region11: #{question_gen_forward.1} parent=0 // pred_check_branch
    %16 = sbr.rel (0) target = $region13
  $region12: #{question_gen_forward.1} parent=0 // pred_region
    _
  $region13: #{question_gen_forward.1} parent=0 // pred_fallthru
    _
  // Predicated region
  $region14: #{question_gen_forward.1} parent=0 // pred_check
    _
  $region15: #{question_gen_forward.1} parent=0 // pred_check_branch
    %18 = sbr.rel (0) target = $region17
  $region16: #{question_gen_forward.1} parent=0 // pred_region
    _
  $region17: #{question_gen_forward.1} parent=0 // pred_fallthru
    _
  // Predicated region
  $region18: #{question_gen_forward.1} parent=0 // pred_check
    _
  $region19: #{question_gen_forward.1} parent=0 // pred_check_branch
    %20 = sbr.rel (0) target = $region21
  $region20: #{question_gen_forward.1} parent=0 // pred_region
    _
  $region21: #{question_gen_forward.1} parent=0 // pred_fallthru
    _
  // Predicated region
  $region22: #{question_gen_forward.1} parent=0 // pred_check
    _
  $region23: #{question_gen_forward.1} parent=0 // pred_check_branch
    %22 = sbr.rel (0) target = $region25
  $region24: #{question_gen_forward.1} parent=0 // pred_region
    _
  $region25: #{question_gen_forward.1} parent=0 // pred_fallthru
    _
  %v24 = vld [vmem:[%s2] sm:$0xf]
  %v25 = vld [vmem:[%s2 + $0x4] sm:$0xf]
  %v26 = vld [vmem:[%s2 + $0x8] sm:$0xf]
  %v27 = vld [vmem:[%s2 + $0xc] sm:$0xf]
  %v28 = vld [vmem:[%s3] sm:$0xf]
  %v29 = vld [vmem:[%s3 + $0x4] sm:$0xf]
  %v30 = vld [vmem:[%s3 + $0x8] sm:$0xf]
  %v31 = vld [vmem:[%s3 + $0xc] sm:$0xf]
  %v32 = vld [vmem:[%s4] sm:$0x1]
  %v33 = vld [vmem:[%s1] sm:$0xff]
  %v34 = vld [vmem:[%s0] sm:$0xf]
  %v35 = vld [vmem:[%s0 + $0x4] sm:$0xf]
  %v36 = vld [vmem:[%s0 + $0x8] sm:$0xf]
  %v37 = vld [vmem:[%s0 + $0xc] sm:$0xf]
  %v38 = vld [vmem:[%s0 + $0x10] sm:$0xf]
  %v39 = vld [vmem:[%s0 + $0x14] sm:$0xf]
  %v40 = vld [vmem:[%s0 + $0x18] sm:$0xf]
  %v41 = vld [vmem:[%s0 + $0x1c] sm:$0xf]
  %v42 = vld [vmem:[%s0 + $0x20] sm:$0xf]
  %v44 = vlaneseq
  %v45 = vshrl.u32 %v44, 7
  %v46 = vsub.s32 0, %v45
  %v47 = vrot.slane %v32, %v46
  %v58 = vunpack.c.l.b16 %v34
  %v59 = vunpack.c.l.b16 %v35
  %v60 = vunpack.c.l.b16 %v36
  %v61 = vunpack.c.l.b16 %v37
  %v62 = vunpack.c.l.b16 %v38
  %v63 = vunpack.c.l.b16 %v39
  %v64 = vunpack.c.l.b16 %v40
  %v65 = vunpack.c.l.b16 %v41
  %v66 = vunpack.c.l.b16 %v42
  %v67 = vpack.c.b16 %v59, %v58
  %v68 = vpack.c.b16 %v61, %v60
  %v69 = vpack.c.b16 %v63, %v62
  %v70 = vpack.c.b16 %v65, %v64
  %v71 = vpack.c.b16 %v66, %v66
  %v76 = vunpack.c.l.b16 %v24
  %v77 = vunpack.c.l.b16 %v25
  %v78 = vunpack.c.l.b16 %v26
  %v79 = vunpack.c.l.b16 %v27
  %v80 = vpack.c.b16 %v77, %v76
  %v81 = vpack.c.b16 %v79, %v78
  %vm84 = vcmask 261120
  %v86 = vsel %vm84, %v67, 0
  %v89 = vsel %vm84, %v68, 0
  %v92 = vsel %vm84, %v69, 0
  %v95 = vsel %vm84, %v70, 0
  %v98 = vsel %vm84, %v71, 0
  %100 = vmatprep.subr.bf16.mxu0 0
  %101 = vmatpush1.bf16.msra.mxu0 %v80
  %102 = vmatprep.subr.bf16.mxu0 0
  %103 = vmatpush1.bf16.msra.mxu0 %v81
  %104 = vmatprep.subr.bf16.mxu0 0
  %105 = vmatpush1.bf16.msra.mxu0 0
  %106 = vmatprep.subr.bf16.mxu0 0
  %107 = vmatpush1.bf16.msra.mxu0 0
  %108 = vmatprep.subr.bf16.mxu0 0
  %109 = vmatpush1.bf16.msra.mxu0 0
  %110 = vmatprep.subr.bf16.mxu0 0
  %111 = vmatpush1.bf16.msra.mxu0 0
  %112 = vmatprep.subr.bf16.mxu0 0
  %113 = vmatpush1.bf16.msra.mxu0 0
  %114 = vmatprep.subr.bf16.mxu0 0
  %115 = vmatpush1.bf16.msra.mxu0 0
  %116 = vmatprep.subr.bf16.mxu0 0
  %117 = vmatpush1.bf16.msra.mxu0 0
  %118 = vmatprep.subr.bf16.mxu0 0
  %119 = vmatpush1.bf16.msra.mxu0 0
  %120 = vmatprep.subr.bf16.mxu0 0
  %121 = vmatpush1.bf16.msra.mxu0 0
  %122 = vmatprep.subr.bf16.mxu0 0
  %123 = vmatpush1.bf16.msra.mxu0 0
  %124 = vmatprep.subr.bf16.mxu0 0
  %125 = vmatpush1.bf16.msra.mxu0 0
  %126 = vmatprep.subr.bf16.mxu0 0
  %127 = vmatpush1.bf16.msra.mxu0 0
  %128 = vmatprep.subr.bf16.mxu0 0
  %129 = vmatpush1.bf16.msra.mxu0 0
  %130 = vmatprep.subr.bf16.mxu0 0
  %131 = vmatpush1.bf16.msra.mxu0 0
  %132 = vmatprep.mubr.bf16.mxu0 0
  %133 = vmatmul.mubr.bf16.gmra.mrb[0].mxu0 %v86
  %v134 = vpop.f32.mrb[0].mxu0
  %v135 = vadd.f32 %v47, %v134
  %v136 = vpop.f32.mrb[0].mxu0
  %v137 = vpop.f32.mrb[0].mxu0
  %v138 = vadd.f32 %v47, %v137
  %v139 = vpop.f32.mrb[0].mxu0
  %140 = vmatprep.mubr.bf16.mxu0 0
  %141 = vmatmul.mubr.bf16.gmra.mrb[0].mxu0 %v89
  %v142 = vpop.f32.mrb[0].mxu0
  %v143 = vadd.f32 %v47, %v142
  %v144 = vpop.f32.mrb[0].mxu0
  %v145 = vpop.f32.mrb[0].mxu0
  %v146 = vadd.f32 %v47, %v145
  %v147 = vpop.f32.mrb[0].mxu0
  %148 = vmatprep.mubr.bf16.mxu0 0
  %149 = vmatmul.mubr.bf16.gmra.mrb[0].mxu0 %v92
  %v150 = vpop.f32.mrb[0].mxu0
  %v151 = vadd.f32 %v47, %v150
  %v152 = vpop.f32.mrb[0].mxu0
  %v153 = vpop.f32.mrb[0].mxu0
  %v154 = vadd.f32 %v47, %v153
  %v155 = vpop.f32.mrb[0].mxu0
  %156 = vmatprep.mubr.bf16.mxu0 0
  %157 = vmatmul.mubr.bf16.gmra.mrb[0].mxu0 %v95
  %v158 = vpop.f32.mrb[0].mxu0
  %v159 = vadd.f32 %v47, %v158
  %v160 = vpop.f32.mrb[0].mxu0
  %v161 = vpop.f32.mrb[0].mxu0
  %v162 = vadd.f32 %v47, %v161
  %v163 = vpop.f32.mrb[0].mxu0
  %164 = vmatprep.mubr.bf16.mxu0 0
  %165 = vmatmul.mubr.bf16.gmra.mrb[0].mxu0 %v98
  %v166 = vpop.f32.mrb[0].mxu0
  %v167 = vadd.f32 %v47, %v166
  %v168 = vpop.f32.mrb[0].mxu0
  %v169 = vpop.f32.mrb[0].mxu0
  %v170 = vpop.f32.mrb[0].mxu0
  %171 = vdwg.mxu0
  %v172 = vxor.u32 %v135, 2147483648
  %v173 = vmul.f32 %v172, 1.442695
  %v174 = vpow.pop %v173
  %v175 = vadd.f32 %v174, 1.0
  %v176 = vrcp.pop %v175
  %v177 = vmul.f32 1.0, %v176
  %v178 = vmul.f32 %v177, 2.0
  %v179 = vsub.f32 %v178, 1.0
  %181 = vrot.lane.b32.xlu0 %v179, 64
  %v182 = vpop.permute.xlu0 %181
  %v184 = vmul.f32 %v177, %v182
  %v185 = vtanh.pop %v184
  %187 = vrot.lane.b32.xlu0 %v185, 96
  %v188 = vpop.permute.xlu0 %187
  %v190 = vmul.f32 %v177, %v188
  %v191 = vpack.c.bf16 %v190, %v190
  %193 = vrot.lane.b32.xlu0 %v191, 32
  %v194 = vpop.permute.xlu0 %193
  %v199 = vunpack.c.l.b16 %v28
  %v200 = vunpack.c.l.b16 %v29
  %v201 = vunpack.c.l.b16 %v30
  %v202 = vunpack.c.l.b16 %v31
  %v203 = vpack.c.b16 %v200, %v199
  %v204 = vpack.c.b16 %v202, %v201
  %v208 = vsel %vm84, %v194, 0
  %210 = vmatprep.subr.bf16.mxu0 0
  %211 = vmatpush1.bf16.msra.mxu0 %v203
  %212 = vmatprep.subr.bf16.mxu0 0
  %213 = vmatpush1.bf16.msra.mxu0 %v204
  %214 = vmatprep.subr.bf16.mxu0 0
  %215 = vmatpush1.bf16.msra.mxu0 0
  %216 = vmatprep.subr.bf16.mxu0 0
  %217 = vmatpush1.bf16.msra.mxu0 0
  %218 = vmatprep.subr.bf16.mxu0 0
  %219 = vmatpush1.bf16.msra.mxu0 0
  %220 = vmatprep.subr.bf16.mxu0 0
  %221 = vmatpush1.bf16.msra.mxu0 0
  %222 = vmatprep.subr.bf16.mxu0 0
  %223 = vmatpush1.bf16.msra.mxu0 0
  %224 = vmatprep.subr.bf16.mxu0 0
  %225 = vmatpush1.bf16.msra.mxu0 0
  %226 = vmatprep.subr.bf16.mxu0 0
  %227 = vmatpush1.bf16.msra.mxu0 0
  %228 = vmatprep.subr.bf16.mxu0 0
  %229 = vmatpush1.bf16.msra.mxu0 0
  %230 = vmatprep.subr.bf16.mxu0 0
  %231 = vmatpush1.bf16.msra.mxu0 0
  %232 = vmatprep.subr.bf16.mxu0 0
  %233 = vmatpush1.bf16.msra.mxu0 0
  %234 = vmatprep.subr.bf16.mxu0 0
  %235 = vmatpush1.bf16.msra.mxu0 0
  %236 = vmatprep.subr.bf16.mxu0 0
  %237 = vmatpush1.bf16.msra.mxu0 0
  %238 = vmatprep.subr.bf16.mxu0 0
  %239 = vmatpush1.bf16.msra.mxu0 0
  %240 = vmatprep.subr.bf16.mxu0 0
  %241 = vmatpush1.bf16.msra.mxu0 0
  %242 = vmatprep.mubr.bf16.mxu0 0
  %243 = vmatmul.mubr.bf16.gmra.mrb[0].mxu0 %v208
  %v244 = vpop.f32.mrb[0].mxu0
  %v245 = vadd.f32 0.0, %v244
  %v246 = vpop.f32.mrb[0].mxu0
  %v247 = vpop.f32.mrb[0].mxu0
  %v248 = vpop.f32.mrb[0].mxu0
  %249 = vdwg.mxu0
  %v250 = vadd.f32 %v138, %v245
  %v251 = vxor.u32 %v250, 2147483648
  %v252 = vmul.f32 %v251, 1.442695
  %v253 = vpow.pop %v252
  %v254 = vadd.f32 %v253, 1.0
  %v255 = vrcp.pop %v254
  %v256 = vmul.f32 1.0, %v255
  %258 = vrot.lane.b32.xlu0 %v184, 32
  %v259 = vpop.permute.xlu0 %258
  %v261 = vmul.f32 %v256, %v259
  %v262 = vmul.f32 %v256, 2.0
  %v263 = vsub.f32 %v262, 1.0
  %265 = vrot.lane.b32.xlu0 %v263, 64
  %v266 = vpop.permute.xlu0 %265
  %v268 = vmul.f32 %v256, %v266
  %270 = vrot.lane.b32.xlu0 %v268, 32
  %v271 = vpop.permute.xlu0 %270
  %v273 = vadd.f32 %v261, %v271
  %v274 = vtanh.pop %v273
  %276 = vrot.lane.b32.xlu0 %v274, 64
  %v277 = vpop.permute.xlu0 %276
  %v279 = vmul.f32 %v256, %v277
  %vm280 = vcmp.gt.f32.partialorder %v33, 0.0
  %v281 = vsel %vm280, 1, 0
  %v282 = vcvt.s32.f32 %v281
  %284 = vset.pattern.permute.xlu0 0
  %285 = vperm.xlu0 %284, %v282
  %v286 = vpop.permute.xlu0 %285
  %v288 = vmul.f32 %v279, %v286
  %290 = vrot.lane.b32.xlu0 %v288, 32
  %v291 = vpop.permute.xlu0 %290
  %293 = vst.msk [vmem:[#allocation2] sm:$0xff] %vm84, %v291
  %v294 = vpack.c.bf16 %v279, %v279
  %296 = vrot.lane.b32.xlu0 %v294, 32
  %v297 = vpop.permute.xlu0 %296
  %v299 = vsel %vm84, %v297, 0
  %301 = vmatprep.subr.bf16.mxu0 0
  %302 = vmatpush1.bf16.msra.mxu0 %v203
  %303 = vmatprep.subr.bf16.mxu0 0
  %304 = vmatpush1.bf16.msra.mxu0 %v204
  %305 = vmatprep.subr.bf16.mxu0 0
  %306 = vmatpush1.bf16.msra.mxu0 0
  %307 = vmatprep.subr.bf16.mxu0 0
  %308 = vmatpush1.bf16.msra.mxu0 0
  %309 = vmatprep.subr.bf16.mxu0 0
  %310 = vmatpush1.bf16.msra.mxu0 0
  %311 = vmatprep.subr.bf16.mxu0 0
  %312 = vmatpush1.bf16.msra.mxu0 0
  %313 = vmatprep.subr.bf16.mxu0 0
  %314 = vmatpush1.bf16.msra.mxu0 0
  %315 = vmatprep.subr.bf16.mxu0 0
  %316 = vmatpush1.bf16.msra.mxu0 0
  %317 = vmatprep.subr.bf16.mxu0 0
  %318 = vmatpush1.bf16.msra.mxu0 0
  %319 = vmatprep.subr.bf16.mxu0 0
  %320 = vmatpush1.bf16.msra.mxu0 0
  %321 = vmatprep.subr.bf16.mxu0 0
  %322 = vmatpush1.bf16.msra.mxu0 0
  %323 = vmatprep.subr.bf16.mxu0 0
  %324 = vmatpush1.bf16.msra.mxu0 0
  %325 = vmatprep.subr.bf16.mxu0 0
  %326 = vmatpush1.bf16.msra.mxu0 0
  %327 = vmatprep.subr.bf16.mxu0 0
  %328 = vmatpush1.bf16.msra.mxu0 0
  %329 = vmatprep.subr.bf16.mxu0 0
  %330 = vmatpush1.bf16.msra.mxu0 0
  %331 = vmatprep.subr.bf16.mxu0 0
  %332 = vmatpush1.bf16.msra.mxu0 0
  %333 = vmatprep.mubr.bf16.mxu0 0
  %334 = vmatmul.mubr.bf16.gmra.mrb[0].mxu0 %v299
  %v335 = vpop.f32.mrb[0].mxu0
  %v336 = vadd.f32 0.0, %v335
  %v337 = vpop.f32.mrb[0].mxu0
  %v338 = vpop.f32.mrb[0].mxu0
  %v339 = vpop.f32.mrb[0].mxu0
  %340 = vdwg.mxu0
  %v341 = vadd.f32 %v143, %v336
  %v342 = vxor.u32 %v341, 2147483648
  %v343 = vmul.f32 %v342, 1.442695
  %v344 = vpow.pop %v343
  %v345 = vadd.f32 %v344, 1.0
  %v346 = vrcp.pop %v345
  %v347 = vmul.f32 1.0, %v346
  %v348 = vmul.f32 %v347, %v273
  %v349 = vmul.f32 %v347, 2.0
  %v350 = vsub.f32 %v349, 1.0
  %352 = vrot.lane.b32.xlu0 %v350, 64
  %v353 = vpop.permute.xlu0 %352
  %v355 = vmul.f32 %v347, %v353
  %357 = vrot.lane.b32.xlu0 %v355, 32
  %v358 = vpop.permute.xlu0 %357
  %v360 = vadd.f32 %v348, %v358
  %v361 = vtanh.pop %v360
  %363 = vrot.lane.b32.xlu0 %v361, 64
  %v364 = vpop.permute.xlu0 %363
  %v366 = vmul.f32 %v347, %v364
  %vm367 = vcmp.gt.f32.partialorder %v33, 1.0
  %v368 = vsel %vm367, 1, 0
  %v369 = vcvt.s32.f32 %v368
  %371 = vset.pattern.permute.xlu0 0
  %372 = vperm.xlu0 %371, %v369
  %v373 = vpop.permute.xlu0 %372
  %v375 = vmul.f32 %v366, %v373
  %377 = vrot.lane.b32.xlu0 %v375, 32
  %v378 = vpop.permute.xlu0 %377
  %380 = vst.msk [vmem:[#allocation2 + $0x8] sm:$0xff] %vm84, %v378
  %v381 = vpack.c.bf16 %v366, %v366
  %383 = vrot.lane.b32.xlu0 %v381, 32
  %v384 = vpop.permute.xlu0 %383
  %v386 = vsel %vm84, %v384, 0
  %388 = vmatprep.subr.bf16.mxu0 0
  %389 = vmatpush1.bf16.msra.mxu0 %v203
  %390 = vmatprep.subr.bf16.mxu0 0
  %391 = vmatpush1.bf16.msra.mxu0 %v204
  %392 = vmatprep.subr.bf16.mxu0 0
  %393 = vmatpush1.bf16.msra.mxu0 0
  %394 = vmatprep.subr.bf16.mxu0 0
  %395 = vmatpush1.bf16.msra.mxu0 0
  %396 = vmatprep.subr.bf16.mxu0 0
  %397 = vmatpush1.bf16.msra.mxu0 0
  %398 = vmatprep.subr.bf16.mxu0 0
  %399 = vmatpush1.bf16.msra.mxu0 0
  %400 = vmatprep.subr.bf16.mxu0 0
  %401 = vmatpush1.bf16.msra.mxu0 0
  %402 = vmatprep.subr.bf16.mxu0 0
  %403 = vmatpush1.bf16.msra.mxu0 0
  %404 = vmatprep.subr.bf16.mxu0 0
  %405 = vmatpush1.bf16.msra.mxu0 0
  %406 = vmatprep.subr.bf16.mxu0 0
  %407 = vmatpush1.bf16.msra.mxu0 0
  %408 = vmatprep.subr.bf16.mxu0 0
  %409 = vmatpush1.bf16.msra.mxu0 0
  %410 = vmatprep.subr.bf16.mxu0 0
  %411 = vmatpush1.bf16.msra.mxu0 0
  %412 = vmatprep.subr.bf16.mxu0 0
  %413 = vmatpush1.bf16.msra.mxu0 0
  %414 = vmatprep.subr.bf16.mxu0 0
  %415 = vmatpush1.bf16.msra.mxu0 0
  %416 = vmatprep.subr.bf16.mxu0 0
  %417 = vmatpush1.bf16.msra.mxu0 0
  %418 = vmatprep.subr.bf16.mxu0 0
  %419 = vmatpush1.bf16.msra.mxu0 0
  %420 = vmatprep.mubr.bf16.mxu0 0
  %421 = vmatmul.mubr.bf16.gmra.mrb[0].mxu0 %v386
  %v422 = vpop.f32.mrb[0].mxu0
  %v423 = vadd.f32 0.0, %v422
  %v424 = vpop.f32.mrb[0].mxu0
  %v425 = vpop.f32.mrb[0].mxu0
  %v426 = vpop.f32.mrb[0].mxu0
  %427 = vdwg.mxu0
  %v428 = vadd.f32 %v146, %v423
  %v429 = vxor.u32 %v428, 2147483648
  %v430 = vmul.f32 %v429, 1.442695
  %v431 = vpow.pop %v430
  %v432 = vadd.f32 %v431, 1.0
  %v433 = vrcp.pop %v432
  %v434 = vmul.f32 1.0, %v433
  %v435 = vmul.f32 %v434, %v360
  %v436 = vmul.f32 %v434, 2.0
  %v437 = vsub.f32 %v436, 1.0
  %439 = vrot.lane.b32.xlu0 %v437, 64
  %v440 = vpop.permute.xlu0 %439
  %v442 = vmul.f32 %v434, %v440
  %444 = vrot.lane.b32.xlu0 %v442, 32
  %v445 = vpop.permute.xlu0 %444
  %v447 = vadd.f32 %v435, %v445
  %v448 = vtanh.pop %v447
  %450 = vrot.lane.b32.xlu0 %v448, 64
  %v451 = vpop.permute.xlu0 %450
  %v453 = vmul.f32 %v434, %v451
  %vm454 = vcmp.gt.f32.partialorder %v33, 2.0
  %v455 = vsel %vm454, 1, 0
  %v456 = vcvt.s32.f32 %v455
  %458 = vset.pattern.permute.xlu0 0
  %459 = vperm.xlu0 %458, %v456
  %v460 = vpop.permute.xlu0 %459
  %v462 = vmul.f32 %v453, %v460
  %464 = vrot.lane.b32.xlu0 %v462, 32
  %v465 = vpop.permute.xlu0 %464
  %467 = vst.msk [vmem:[#allocation2 + $0x10] sm:$0xff] %vm84, %v465
  %v468 = vpack.c.bf16 %v453, %v453
  %470 = vrot.lane.b32.xlu0 %v468, 32
  %v471 = vpop.permute.xlu0 %470
  %v473 = vsel %vm84, %v471, 0
  %475 = vmatprep.subr.bf16.mxu0 0
  %476 = vmatpush1.bf16.msra.mxu0 %v203
  %477 = vmatprep.subr.bf16.mxu0 0
  %478 = vmatpush1.bf16.msra.mxu0 %v204
  %479 = vmatprep.subr.bf16.mxu0 0
  %480 = vmatpush1.bf16.msra.mxu0 0
  %481 = vmatprep.subr.bf16.mxu0 0
  %482 = vmatpush1.bf16.msra.mxu0 0
  %483 = vmatprep.subr.bf16.mxu0 0
  %484 = vmatpush1.bf16.msra.mxu0 0
  %485 = vmatprep.subr.bf16.mxu0 0
  %486 = vmatpush1.bf16.msra.mxu0 0
  %487 = vmatprep.subr.bf16.mxu0 0
  %488 = vmatpush1.bf16.msra.mxu0 0
  %489 = vmatprep.subr.bf16.mxu0 0
  %490 = vmatpush1.bf16.msra.mxu0 0
  %491 = vmatprep.subr.bf16.mxu0 0
  %492 = vmatpush1.bf16.msra.mxu0 0
  %493 = vmatprep.subr.bf16.mxu0 0
  %494 = vmatpush1.bf16.msra.mxu0 0
  %495 = vmatprep.subr.bf16.mxu0 0
  %496 = vmatpush1.bf16.msra.mxu0 0
  %497 = vmatprep.subr.bf16.mxu0 0
  %498 = vmatpush1.bf16.msra.mxu0 0
  %499 = vmatprep.subr.bf16.mxu0 0
  %500 = vmatpush1.bf16.msra.mxu0 0
  %501 = vmatprep.subr.bf16.mxu0 0
  %502 = vmatpush1.bf16.msra.mxu0 0
  %503 = vmatprep.subr.bf16.mxu0 0
  %504 = vmatpush1.bf16.msra.mxu0 0
  %505 = vmatprep.subr.bf16.mxu0 0
  %506 = vmatpush1.bf16.msra.mxu0 0
  %507 = vmatprep.mubr.bf16.mxu0 0
  %508 = vmatmul.mubr.bf16.gmra.mrb[0].mxu0 %v473
  %v509 = vpop.f32.mrb[0].mxu0
  %v510 = vadd.f32 0.0, %v509
  %v511 = vpop.f32.mrb[0].mxu0
  %v512 = vpop.f32.mrb[0].mxu0
  %v513 = vpop.f32.mrb[0].mxu0
  %514 = vdwg.mxu0
  %v515 = vadd.f32 %v151, %v510
  %v516 = vxor.u32 %v515, 2147483648
  %v517 = vmul.f32 %v516, 1.442695
  %v518 = vpow.pop %v517
  %v519 = vadd.f32 %v518, 1.0
  %v520 = vrcp.pop %v519
  %v521 = vmul.f32 1.0, %v520
  %v522 = vmul.f32 %v521, %v447
  %v523 = vmul.f32 %v521, 2.0
  %v524 = vsub.f32 %v523, 1.0
  %526 = vrot.lane.b32.xlu0 %v524, 64
  %v527 = vpop.permute.xlu0 %526
  %v529 = vmul.f32 %v521, %v527
  %531 = vrot.lane.b32.xlu0 %v529, 32
  %v532 = vpop.permute.xlu0 %531
  %v534 = vadd.f32 %v522, %v532
  %v535 = vtanh.pop %v534
  %537 = vrot.lane.b32.xlu0 %v535, 64
  %v538 = vpop.permute.xlu0 %537
  %v540 = vmul.f32 %v521, %v538
  %vm541 = vcmp.gt.f32.partialorder %v33, 3.0
  %v542 = vsel %vm541, 1, 0
  %v543 = vcvt.s32.f32 %v542
  %545 = vset.pattern.permute.xlu0 0
  %546 = vperm.xlu0 %545, %v543
  %v547 = vpop.permute.xlu0 %546
  %v549 = vmul.f32 %v540, %v547
  %551 = vrot.lane.b32.xlu0 %v549, 32
  %v552 = vpop.permute.xlu0 %551
  %554 = vst.msk [vmem:[#allocation2 + $0x18] sm:$0xff] %vm84, %v552
  %v555 = vpack.c.bf16 %v540, %v540
  %557 = vrot.lane.b32.xlu0 %v555, 32
  %v558 = vpop.permute.xlu0 %557
  %v560 = vsel %vm84, %v558, 0
  %562 = vmatprep.subr.bf16.mxu0 0
  %563 = vmatpush1.bf16.msra.mxu0 %v203
  %564 = vmatprep.subr.bf16.mxu0 0
  %565 = vmatpush1.bf16.msra.mxu0 %v204
  %566 = vmatprep.subr.bf16.mxu0 0
  %567 = vmatpush1.bf16.msra.mxu0 0
  %568 = vmatprep.subr.bf16.mxu0 0
  %569 = vmatpush1.bf16.msra.mxu0 0
  %570 = vmatprep.subr.bf16.mxu0 0
  %571 = vmatpush1.bf16.msra.mxu0 0
  %572 = vmatprep.subr.bf16.mxu0 0
  %573 = vmatpush1.bf16.msra.mxu0 0
  %574 = vmatprep.subr.bf16.mxu0 0
  %575 = vmatpush1.bf16.msra.mxu0 0
  %576 = vmatprep.subr.bf16.mxu0 0
  %577 = vmatpush1.bf16.msra.mxu0 0
  %578 = vmatprep.subr.bf16.mxu0 0
  %579 = vmatpush1.bf16.msra.mxu0 0
  %580 = vmatprep.subr.bf16.mxu0 0
  %581 = vmatpush1.bf16.msra.mxu0 0
  %582 = vmatprep.subr.bf16.mxu0 0
  %583 = vmatpush1.bf16.msra.mxu0 0
  %584 = vmatprep.subr.bf16.mxu0 0
  %585 = vmatpush1.bf16.msra.mxu0 0
  %586 = vmatprep.subr.bf16.mxu0 0
  %587 = vmatpush1.bf16.msra.mxu0 0
  %588 = vmatprep.subr.bf16.mxu0 0
  %589 = vmatpush1.bf16.msra.mxu0 0
  %590 = vmatprep.subr.bf16.mxu0 0
  %591 = vmatpush1.bf16.msra.mxu0 0
  %592 = vmatprep.subr.bf16.mxu0 0
  %593 = vmatpush1.bf16.msra.mxu0 0
  %594 = vmatprep.mubr.bf16.mxu0 0
  %595 = vmatmul.mubr.bf16.gmra.mrb[0].mxu0 %v560
  %v596 = vpop.f32.mrb[0].mxu0
  %v597 = vadd.f32 0.0, %v596
  %v598 = vpop.f32.mrb[0].mxu0
  %v599 = vpop.f32.mrb[0].mxu0
  %v600 = vpop.f32.mrb[0].mxu0
  %601 = vdwg.mxu0
  %v602 = vadd.f32 %v154, %v597
  %v603 = vxor.u32 %v602, 2147483648
  %v604 = vmul.f32 %v603, 1.442695
  %v605 = vpow.pop %v604
  %v606 = vadd.f32 %v605, 1.0
  %v607 = vrcp.pop %v606
  %v608 = vmul.f32 1.0, %v607
  %v609 = vmul.f32 %v608, %v534
  %v610 = vmul.f32 %v608, 2.0
  %v611 = vsub.f32 %v610, 1.0
  %613 = vrot.lane.b32.xlu0 %v611, 64
  %v614 = vpop.permute.xlu0 %613
  %v616 = vmul.f32 %v608, %v614
  %618 = vrot.lane.b32.xlu0 %v616, 32
  %v619 = vpop.permute.xlu0 %618
  %v621 = vadd.f32 %v609, %v619
  %v622 = vtanh.pop %v621
  %624 = vrot.lane.b32.xlu0 %v622, 64
  %v625 = vpop.permute.xlu0 %624
  %v627 = vmul.f32 %v608, %v625
  %vm628 = vcmp.gt.f32.partialorder %v33, 4.0
  %v629 = vsel %vm628, 1, 0
  %v630 = vcvt.s32.f32 %v629
  %632 = vset.pattern.permute.xlu0 0
  %633 = vperm.xlu0 %632, %v630
  %v634 = vpop.permute.xlu0 %633
  %v636 = vmul.f32 %v627, %v634
  %638 = vrot.lane.b32.xlu0 %v636, 32
  %v639 = vpop.permute.xlu0 %638
  %641 = vst.msk [vmem:[#allocation2 + $0x20] sm:$0xff] %vm84, %v639
  %v642 = vpack.c.bf16 %v627, %v627
  %644 = vrot.lane.b32.xlu0 %v642, 32
  %v645 = vpop.permute.xlu0 %644
  %v647 = vsel %vm84, %v645, 0
  %649 = vmatprep.subr.bf16.mxu0 0
  %650 = vmatpush1.bf16.msra.mxu0 %v203
  %651 = vmatprep.subr.bf16.mxu0 0
  %652 = vmatpush1.bf16.msra.mxu0 %v204
  %653 = vmatprep.subr.bf16.mxu0 0
  %654 = vmatpush1.bf16.msra.mxu0 0
  %655 = vmatprep.subr.bf16.mxu0 0
  %656 = vmatpush1.bf16.msra.mxu0 0
  %657 = vmatprep.subr.bf16.mxu0 0
  %658 = vmatpush1.bf16.msra.mxu0 0
  %659 = vmatprep.subr.bf16.mxu0 0
  %660 = vmatpush1.bf16.msra.mxu0 0
  %661 = vmatprep.subr.bf16.mxu0 0
  %662 = vmatpush1.bf16.msra.mxu0 0
  %663 = vmatprep.subr.bf16.mxu0 0
  %664 = vmatpush1.bf16.msra.mxu0 0
  %665 = vmatprep.subr.bf16.mxu0 0
  %666 = vmatpush1.bf16.msra.mxu0 0
  %667 = vmatprep.subr.bf16.mxu0 0
  %668 = vmatpush1.bf16.msra.mxu0 0
  %669 = vmatprep.subr.bf16.mxu0 0
  %670 = vmatpush1.bf16.msra.mxu0 0
  %671 = vmatprep.subr.bf16.mxu0 0
  %672 = vmatpush1.bf16.msra.mxu0 0
  %673 = vmatprep.subr.bf16.mxu0 0
  %674 = vmatpush1.bf16.msra.mxu0 0
  %675 = vmatprep.subr.bf16.mxu0 0
  %676 = vmatpush1.bf16.msra.mxu0 0
  %677 = vmatprep.subr.bf16.mxu0 0
  %678 = vmatpush1.bf16.msra.mxu0 0
  %679 = vmatprep.subr.bf16.mxu0 0
  %680 = vmatpush1.bf16.msra.mxu0 0
  %681 = vmatprep.mubr.bf16.mxu0 0
  %682 = vmatmul.mubr.bf16.gmra.mrb[0].mxu0 %v647
  %v683 = vpop.f32.mrb[0].mxu0
  %v684 = vadd.f32 0.0, %v683
  %v685 = vpop.f32.mrb[0].mxu0
  %v686 = vpop.f32.mrb[0].mxu0
  %v687 = vpop.f32.mrb[0].mxu0
  %688 = vdwg.mxu0
  %v689 = vadd.f32 %v159, %v684
  %v690 = vxor.u32 %v689, 2147483648
  %v691 = vmul.f32 %v690, 1.442695
  %v692 = vpow.pop %v691
  %v693 = vadd.f32 %v692, 1.0
  %v694 = vrcp.pop %v693
  %v695 = vmul.f32 1.0, %v694
  %v696 = vmul.f32 %v695, %v621
  %v697 = vmul.f32 %v695, 2.0
  %v698 = vsub.f32 %v697, 1.0
  %700 = vrot.lane.b32.xlu0 %v698, 64
  %v701 = vpop.permute.xlu0 %700
  %v703 = vmul.f32 %v695, %v701
  %705 = vrot.lane.b32.xlu0 %v703, 32
  %v706 = vpop.permute.xlu0 %705
  %v708 = vadd.f32 %v696, %v706
  %v709 = vtanh.pop %v708
  %711 = vrot.lane.b32.xlu0 %v709, 64
  %v712 = vpop.permute.xlu0 %711
  %v714 = vmul.f32 %v695, %v712
  %vm715 = vcmp.gt.f32.partialorder %v33, 5.0
  %v716 = vsel %vm715, 1, 0
  %v717 = vcvt.s32.f32 %v716
  %719 = vset.pattern.permute.xlu0 0
  %720 = vperm.xlu0 %719, %v717
  %v721 = vpop.permute.xlu0 %720
  %v723 = vmul.f32 %v714, %v721
  %725 = vrot.lane.b32.xlu0 %v723, 32
  %v726 = vpop.permute.xlu0 %725
  %728 = vst.msk [vmem:[#allocation2 + $0x28] sm:$0xff] %vm84, %v726
  %v729 = vpack.c.bf16 %v714, %v714
  %731 = vrot.lane.b32.xlu0 %v729, 32
  %v732 = vpop.permute.xlu0 %731
  %v734 = vsel %vm84, %v732, 0
  %736 = vmatprep.subr.bf16.mxu0 0
  %737 = vmatpush1.bf16.msra.mxu0 %v203
  %738 = vmatprep.subr.bf16.mxu0 0
  %739 = vmatpush1.bf16.msra.mxu0 %v204
  %740 = vmatprep.subr.bf16.mxu0 0
  %741 = vmatpush1.bf16.msra.mxu0 0
  %742 = vmatprep.subr.bf16.mxu0 0
  %743 = vmatpush1.bf16.msra.mxu0 0
  %744 = vmatprep.subr.bf16.mxu0 0
  %745 = vmatpush1.bf16.msra.mxu0 0
  %746 = vmatprep.subr.bf16.mxu0 0
  %747 = vmatpush1.bf16.msra.mxu0 0
  %748 = vmatprep.subr.bf16.mxu0 0
  %749 = vmatpush1.bf16.msra.mxu0 0
  %750 = vmatprep.subr.bf16.mxu0 0
  %751 = vmatpush1.bf16.msra.mxu0 0
  %752 = vmatprep.subr.bf16.mxu0 0
  %753 = vmatpush1.bf16.msra.mxu0 0
  %754 = vmatprep.subr.bf16.mxu0 0
  %755 = vmatpush1.bf16.msra.mxu0 0
  %756 = vmatprep.subr.bf16.mxu0 0
  %757 = vmatpush1.bf16.msra.mxu0 0
  %758 = vmatprep.subr.bf16.mxu0 0
  %759 = vmatpush1.bf16.msra.mxu0 0
  %760 = vmatprep.subr.bf16.mxu0 0
  %761 = vmatpush1.bf16.msra.mxu0 0
  %762 = vmatprep.subr.bf16.mxu0 0
  %763 = vmatpush1.bf16.msra.mxu0 0
  %764 = vmatprep.subr.bf16.mxu0 0
  %765 = vmatpush1.bf16.msra.mxu0 0
  %766 = vmatprep.subr.bf16.mxu0 0
  %767 = vmatpush1.bf16.msra.mxu0 0
  %768 = vmatprep.mubr.bf16.mxu0 0
  %769 = vmatmul.mubr.bf16.gmra.mrb[0].mxu0 %v734
  %v770 = vpop.f32.mrb[0].mxu0
  %v771 = vadd.f32 0.0, %v770
  %v772 = vpop.f32.mrb[0].mxu0
  %v773 = vpop.f32.mrb[0].mxu0
  %v774 = vpop.f32.mrb[0].mxu0
  %775 = vdwg.mxu0
  %v776 = vadd.f32 %v162, %v771
  %v777 = vxor.u32 %v776, 2147483648
  %v778 = vmul.f32 %v777, 1.442695
  %v779 = vpow.pop %v778
  %v780 = vadd.f32 %v779, 1.0
  %v781 = vrcp.pop %v780
  %v782 = vmul.f32 1.0, %v781
  %v783 = vmul.f32 %v782, %v708
  %v784 = vmul.f32 %v782, 2.0
  %v785 = vsub.f32 %v784, 1.0
  %787 = vrot.lane.b32.xlu0 %v785, 64
  %v788 = vpop.permute.xlu0 %787
  %v790 = vmul.f32 %v782, %v788
  %792 = vrot.lane.b32.xlu0 %v790, 32
  %v793 = vpop.permute.xlu0 %792
  %v795 = vadd.f32 %v783, %v793
  %v796 = vtanh.pop %v795
  %798 = vrot.lane.b32.xlu0 %v796, 64
  %v799 = vpop.permute.xlu0 %798
  %v801 = vmul.f32 %v782, %v799
  %vm802 = vcmp.gt.f32.partialorder %v33, 6.0
  %v803 = vsel %vm802, 1, 0
  %v804 = vcvt.s32.f32 %v803
  %806 = vset.pattern.permute.xlu0 0
  %807 = vperm.xlu0 %806, %v804
  %v808 = vpop.permute.xlu0 %807
  %v810 = vmul.f32 %v801, %v808
  %812 = vrot.lane.b32.xlu0 %v810, 32
  %v813 = vpop.permute.xlu0 %812
  %815 = vst.msk [vmem:[#allocation2 + $0x30] sm:$0xff] %vm84, %v813
  %v816 = vpack.c.bf16 %v801, %v801
  %818 = vrot.lane.b32.xlu0 %v816, 32
  %v819 = vpop.permute.xlu0 %818
  %v821 = vsel %vm84, %v819, 0
  %823 = vmatprep.subr.bf16.mxu0 0
  %824 = vmatpush1.bf16.msra.mxu0 %v203
  %825 = vmatprep.subr.bf16.mxu0 0
  %826 = vmatpush1.bf16.msra.mxu0 %v204
  %827 = vmatprep.subr.bf16.mxu0 0
  %828 = vmatpush1.bf16.msra.mxu0 0
  %829 = vmatprep.subr.bf16.mxu0 0
  %830 = vmatpush1.bf16.msra.mxu0 0
  %831 = vmatprep.subr.bf16.mxu0 0
  %832 = vmatpush1.bf16.msra.mxu0 0
  %833 = vmatprep.subr.bf16.mxu0 0
  %834 = vmatpush1.bf16.msra.mxu0 0
  %835 = vmatprep.subr.bf16.mxu0 0
  %836 = vmatpush1.bf16.msra.mxu0 0
  %837 = vmatprep.subr.bf16.mxu0 0
  %838 = vmatpush1.bf16.msra.mxu0 0
  %839 = vmatprep.subr.bf16.mxu0 0
  %840 = vmatpush1.bf16.msra.mxu0 0
  %841 = vmatprep.subr.bf16.mxu0 0
  %842 = vmatpush1.bf16.msra.mxu0 0
  %843 = vmatprep.subr.bf16.mxu0 0
  %844 = vmatpush1.bf16.msra.mxu0 0
  %845 = vmatprep.subr.bf16.mxu0 0
  %846 = vmatpush1.bf16.msra.mxu0 0
  %847 = vmatprep.subr.bf16.mxu0 0
  %848 = vmatpush1.bf16.msra.mxu0 0
  %849 = vmatprep.subr.bf16.mxu0 0
  %850 = vmatpush1.bf16.msra.mxu0 0
  %851 = vmatprep.subr.bf16.mxu0 0
  %852 = vmatpush1.bf16.msra.mxu0 0
  %853 = vmatprep.subr.bf16.mxu0 0
  %854 = vmatpush1.bf16.msra.mxu0 0
  %855 = vmatprep.mubr.bf16.mxu0 0
  %856 = vmatmul.mubr.bf16.gmra.mrb[0].mxu0 %v821
  %v857 = vpop.f32.mrb[0].mxu0
  %v858 = vadd.f32 0.0, %v857
  %v859 = vpop.f32.mrb[0].mxu0
  %v860 = vpop.f32.mrb[0].mxu0
  %v861 = vpop.f32.mrb[0].mxu0
  %862 = vdwg.mxu0
  %v863 = vadd.f32 %v167, %v858
  %v864 = vxor.u32 %v863, 2147483648
  %v865 = vmul.f32 %v864, 1.442695
  %v866 = vpow.pop %v865
  %v867 = vadd.f32 %v866, 1.0
  %v868 = vrcp.pop %v867
  %v869 = vmul.f32 1.0, %v868
  %v870 = vmul.f32 %v869, %v795
  %v871 = vmul.f32 %v869, 2.0
  %v872 = vsub.f32 %v871, 1.0
  %874 = vrot.lane.b32.xlu0 %v872, 64
  %v875 = vpop.permute.xlu0 %874
  %v877 = vmul.f32 %v869, %v875
  %879 = vrot.lane.b32.xlu0 %v877, 32
  %v880 = vpop.permute.xlu0 %879
  %v882 = vadd.f32 %v870, %v880
  %v883 = vtanh.pop %v882
  %885 = vrot.lane.b32.xlu0 %v883, 64
  %v886 = vpop.permute.xlu0 %885
  %v888 = vmul.f32 %v869, %v886
  %vm889 = vcmp.gt.f32.partialorder %v33, 7.0
  %v890 = vsel %vm889, 1, 0
  %v891 = vcvt.s32.f32 %v890
  %893 = vset.pattern.permute.xlu0 0
  %894 = vperm.xlu0 %893, %v891
  %v895 = vpop.permute.xlu0 %894
  %v897 = vmul.f32 %v888, %v895
  %899 = vrot.lane.b32.xlu0 %v897, 32
  %v900 = vpop.permute.xlu0 %899
  %902 = vst.msk [vmem:[#allocation2 + $0x38] sm:$0xff] %vm84, %v900
  %v903 = vld [vmem:[#allocation2] sm:$0xff]
  %v904 = vld [vmem:[#allocation2 + $0x8] sm:$0xff]
  %v905 = vld [vmem:[#allocation2 + $0x10] sm:$0xff]
  %v906 = vld [vmem:[#allocation2 + $0x18] sm:$0xff]
  %v907 = vld [vmem:[#allocation2 + $0x20] sm:$0xff]
  %v908 = vld [vmem:[#allocation2 + $0x28] sm:$0xff]
  %v909 = vld [vmem:[#allocation2 + $0x30] sm:$0xff]
  %v910 = vld [vmem:[#allocation2 + $0x38] sm:$0xff]
  %v911 = vpack.c.bf16 %v904, %v903
  %v912 = vpack.c.bf16 %v906, %v905
  %v913 = vpack.c.bf16 %v908, %v907
  %v914 = vpack.c.bf16 %v910, %v909
  %v915 = vld [vmem:[%s5] sm:$0xf]
  %v916 = vld [vmem:[%s5 + $0x4] sm:$0xf]
  %v917 = vld [vmem:[%s5 + $0x8] sm:$0xf]
  %v918 = vld [vmem:[%s5 + $0xc] sm:$0xf]
  %v923 = vunpack.c.l.b16 %v915
  %v924 = vunpack.c.l.b16 %v916
  %v925 = vunpack.c.l.b16 %v917
  %v926 = vunpack.c.l.b16 %v918
  %v927 = vpack.c.b16 %v924, %v923
  %v928 = vpack.c.b16 %v926, %v925
  %v932 = vsel %vm84, %v911, 0
  %v935 = vsel %vm84, %v912, 0
  %v938 = vsel %vm84, %v913, 0
  %v941 = vsel %vm84, %v914, 0
  %943 = vmatprep.subr.bf16.mxu0 0
  %944 = vmatpush1.bf16.msra.mxu0 %v927
  %945 = vmatprep.subr.bf16.mxu0 0
  %946 = vmatpush1.bf16.msra.mxu0 %v928
  %947 = vmatprep.subr.bf16.mxu0 0
  %948 = vmatpush1.bf16.msra.mxu0 0
  %949 = vmatprep.subr.bf16.mxu0 0
  %950 = vmatpush1.bf16.msra.mxu0 0
  %951 = vmatprep.subr.bf16.mxu0 0
  %952 = vmatpush1.bf16.msra.mxu0 0
  %953 = vmatprep.subr.bf16.mxu0 0
  %954 = vmatpush1.bf16.msra.mxu0 0
  %955 = vmatprep.subr.bf16.mxu0 0
  %956 = vmatpush1.bf16.msra.mxu0 0
  %957 = vmatprep.subr.bf16.mxu0 0
  %958 = vmatpush1.bf16.msra.mxu0 0
  %959 = vmatprep.subr.bf16.mxu0 0
  %960 = vmatpush1.bf16.msra.mxu0 0
  %961 = vmatprep.subr.bf16.mxu0 0
  %962 = vmatpush1.bf16.msra.mxu0 0
  %963 = vmatprep.subr.bf16.mxu0 0
  %964 = vmatpush1.bf16.msra.mxu0 0
  %965 = vmatprep.subr.bf16.mxu0 0
  %966 = vmatpush1.bf16.msra.mxu0 0
  %967 = vmatprep.subr.bf16.mxu0 0
  %968 = vmatpush1.bf16.msra.mxu0 0
  %969 = vmatprep.subr.bf16.mxu0 0
  %970 = vmatpush1.bf16.msra.mxu0 0
  %971 = vmatprep.subr.bf16.mxu0 0
  %972 = vmatpush1.bf16.msra.mxu0 0
  %973 = vmatprep.subr.bf16.mxu0 0
  %974 = vmatpush1.bf16.msra.mxu0 0
  %975 = vmatprep.mubr.bf16.mxu0 0
  %976 = vmatmul.mubr.bf16.gmra.mrb[0].mxu0 %v932
  %v977 = vpop.f32.mrb[0].mxu0
  %v978 = vadd.f32 0.0, %v977
  %v979 = vpop.f32.mrb[0].mxu0
  %v980 = vpop.f32.mrb[0].mxu0
  %v981 = vadd.f32 0.0, %v980
  %v982 = vpop.f32.mrb[0].mxu0
  %983 = vmatprep.mubr.bf16.mxu0 0
  %984 = vmatmul.mubr.bf16.gmra.mrb[0].mxu0 %v935
  %v985 = vpop.f32.mrb[0].mxu0
  %v986 = vadd.f32 0.0, %v985
  %v987 = vpop.f32.mrb[0].mxu0
  %v988 = vpop.f32.mrb[0].mxu0
  %v989 = vadd.f32 0.0, %v988
  %v990 = vpop.f32.mrb[0].mxu0
  %991 = vmatprep.mubr.bf16.mxu0 0
  %992 = vmatmul.mubr.bf16.gmra.mrb[0].mxu0 %v938
  %v993 = vpop.f32.mrb[0].mxu0
  %v994 = vadd.f32 0.0, %v993
  %v995 = vpop.f32.mrb[0].mxu0
  %v996 = vpop.f32.mrb[0].mxu0
  %v997 = vadd.f32 0.0, %v996
  %v998 = vpop.f32.mrb[0].mxu0
  %999 = vmatprep.mubr.bf16.mxu0 0
  %1000 = vmatmul.mubr.bf16.gmra.mrb[0].mxu0 %v941
  %v1001 = vpop.f32.mrb[0].mxu0
  %v1002 = vadd.f32 0.0, %v1001
  %v1003 = vpop.f32.mrb[0].mxu0
  %v1004 = vpop.f32.mrb[0].mxu0
  %v1005 = vadd.f32 0.0, %v1004
  %v1006 = vpop.f32.mrb[0].mxu0
  %1007 = vdwg.mxu0
  %1008 = vst [vmem:[%s6] sm:$0xff] %v978
  %1009 = vst [vmem:[%s6 + $0x8] sm:$0xff] %v981
  %1010 = vst [vmem:[%s6 + $0x10] sm:$0xff] %v986
  %1011 = vst [vmem:[%s6 + $0x18] sm:$0xff] %v989
  %1012 = vst [vmem:[%s6 + $0x20] sm:$0xff] %v994
  %1013 = vst [vmem:[%s6 + $0x28] sm:$0xff] %v997
  %1014 = vst [vmem:[%s6 + $0x30] sm:$0xff] %v1002
  %1015 = vst [vmem:[%s6 + $0x38] sm:$0xff] %v1005
  // Predicated region
  $region26: #{question_gen_forward.1} parent=0 // pred_check
    _
  $region27: #{question_gen_forward.1} parent=0 // pred_check_branch
    %1017 = sbr.rel (0) target = $region29
  $region28: #{question_gen_forward.1} parent=0 // pred_region
    _
  $region29: #{question_gen_forward.1} parent=0 // pred_fallthru
    _
  // Predicated region
  $region30: #{question_gen_forward.1} parent=0 // pred_check
    _
  $region31: #{question_gen_forward.1} parent=0 // pred_check_branch
    %1019 = sbr.rel (0) target = $region33
  $region32: #{question_gen_forward.1} parent=0 // pred_region
    _
  $region33: #{question_gen_forward.1} parent=0 // pred_fallthru
    _

</llo_original>
